<compile_context>
chip_gen: v7x
topology: tpu7x:2x2x1
jax: 0.10.0
libtpu: 0.0.40
codegen_flags: <defaults>
</compile_context>

<pallas_src>
import functools
import math

import jax
import jax.numpy as jnp
from jax.experimental import pallas as pl
from jax.experimental.pallas import tpu as pltpu


def _leaky(x):
    # LeakyReLU(0.1): max(x, 0.1*x) == x for x >= 0 and 0.1*x for x < 0.
    return jnp.maximum(x, 0.1 * x)


def ghost_kernel(x_ref, w1t_ref, b1_ref, wdw_ref, b2_ref, mask_ref,
                 y1_ref, y2_ref, *, W):
    # x_ref:    (Cin, L)     input; L = Bt*HWp lanes (Bt images, HWp = padded H*W)
    # w1t_ref:  (Cinit, Cin) primary 1x1 conv weight (BN scale folded in)
    # b1_ref:   (Cinit, 1)   folded BN bias (primary branch)
    # wdw_ref:  (Cinit, 9)   depthwise 3x3 taps, row-major (BN scale folded in)
    # b2_ref:   (Cinit, 1)   folded BN bias (cheap branch)
    # mask_ref: (8, L)       0/1 boundary masks for the 8 non-centre taps (resident)
    # y1_ref:   (Cinit, L)   primary-branch output
    # y2_ref:   (C2, L)      cheap-branch output (C2 = oup - Cinit)
    x = x_ref[...]
    L = x.shape[1]

    # ---- primary conv: 1x1 conv == (Cinit,Cin) @ (Cin,L), lane dim full ----
    # TODO(synk): for bf16 models cast x/w1t to bf16 at this dot (and emit bf16
    # outputs) to halve HBM traffic and hit the native MXU path on v6e/v7x; kept
    # f32 here to match the f32 module semantics exactly (v5e VPU is f32-only anyway).
    x1 = jnp.dot(w1t_ref[...], x, preferred_element_type=jnp.float32)
    x1 = _leaky(x1 + b1_ref[...])
    y1_ref[...] = x1.astype(y1_ref.dtype)

    # ---- cheap operation: depthwise 3x3 conv, pad=1, stride=1 ----
    # Neighbour (h+dh, w+dw) of flattened pixel p is p + dh*W + dw: fetch it with a
    # circular lane roll (XLU work, co-issues with the VPU FMAs) and zero the
    # out-of-image positions with the precomputed per-lane 0/1 masks.  Unmasked taps
    # never cross an image boundary, so rolling the whole folded (batch*HWp) lane
    # axis is safe; masked positions read garbage and are multiplied by 0.
    wdw = wdw_ref[...]
    masks = mask_ref[...]
    x2 = wdw[:, 4:5] * x1                       # centre tap: no shift, no mask
    k8 = 0
    for dh in (-1, 0, 1):
        for dw in (-1, 0, 1):
            if dh == 0 and dw == 0:
                continue
            s = dh * W + dw
            shifted = pltpu.roll(x1, (-s) % L, axis=1)
            shifted = shifted * masks[k8:k8 + 1, :]
            k9 = (dh + 1) * 3 + (dw + 1)
            x2 = x2 + wdw[:, k9:k9 + 1] * shifted
            k8 += 1
    x2 = _leaky(x2 + b2_ref[...])
    y2_ref[...] = x2[:y2_ref.shape[0], :].astype(y2_ref.dtype)


def _pick_images_per_step(N, HWp, bytes_per_lane):
    """Images per grid step: large lane tiles (~8 MiB of blocks, safe under v7x's
    64 MiB physical / 32 MiB scoped VMEM) but >=2 grid steps when N>=2 (megacore)."""
    target_lanes = max(1, (8 * 1024 * 1024) // bytes_per_lane)
    bt = max(1, min(N, target_lanes // max(HWp, 1)))
    if N >= 2:
        bt = max(1, min(bt, N // 2))
    while N % bt:                                 # largest divisor of N <= bt
        bt -= 1
    return bt


def ghost_module(x_nchw, params, oup):
    """x_nchw: (N, Cin, H, W) float32. Returns (N, oup, H, W) float32."""
    w1t, b1, wdw9, b2 = params
    N, Cin, H, W = x_nchw.shape
    Cinit = w1t.shape[0]
    assert oup > Cinit, "ratio must be >= 2 so the cheap branch contributes channels"
    C2 = oup - Cinit
    HW = H * W
    HWp = ((HW + 127) // 128) * 128               # lane-dense multiple of 128

    # Rough per-lane VMEM footprint (double-buffered blocks + x1/x2/shifted temps).
    bytes_per_lane = 4 * (2 * (Cin + 8 + Cinit + C2) + 3 * Cinit)
    Bt = _pick_images_per_step(N, HWp, bytes_per_lane)
    L = Bt * HWp
    grid = (N // Bt,)

    # channels-on-sublanes / (batch*spatial)-on-lanes layout
    xt = x_nchw.reshape(N, Cin, HW).transpose(1, 0, 2)        # (Cin, N, HW)
    if HWp != HW:
        xt = jnp.pad(xt, ((0, 0), (0, 0), (0, HWp - HW)))
    x2d = xt.reshape(Cin, N * HWp)

    # 0/1 boundary masks for the 8 non-centre depthwise taps, one row per tap,
    # periodic per image -> shape (8, Bt*HWp); constant index_map keeps it resident.
    q = jnp.arange(HWp, dtype=jnp.int32)
    h = q // W
    w = q % W
    rows = []
    for dh in (-1, 0, 1):
        for dw in (-1, 0, 1):
            if dh == 0 and dw == 0:
                continue
            ok = (h + dh >= 0) & (h + dh <= H - 1) & (w + dw >= 0) & (w + dw <= W - 1)
            rows.append(ok)
    tap_mask = jnp.tile(jnp.stack(rows).astype(jnp.float32), (1, Bt))   # (8, L)

    y1, y2 = pl.pallas_call(
        functools.partial(ghost_kernel, W=W),
        out_shape=(jax.ShapeDtypeStruct((Cinit, N * HWp), jnp.float32),
                   jax.ShapeDtypeStruct((C2, N * HWp), jnp.float32)),
        grid_spec=pltpu.PrefetchScalarGridSpec(
            num_scalar_prefetch=0,
            grid=grid,
            in_specs=[
                pl.BlockSpec((Cin, L), lambda n: (0, n)),
                pl.BlockSpec((Cinit, Cin), lambda n: (0, 0)),
                pl.BlockSpec((Cinit, 1), lambda n: (0, 0)),
                pl.BlockSpec((Cinit, 9), lambda n: (0, 0)),
                pl.BlockSpec((Cinit, 1), lambda n: (0, 0)),
                pl.BlockSpec((8, L), lambda n: (0, 0)),       # resident across steps
            ],
            out_specs=[pl.BlockSpec((Cinit, L), lambda n: (0, n)),
                       pl.BlockSpec((C2, L), lambda n: (0, n))],
        ),
        compiler_params=pltpu.CompilerParams(
            dimension_semantics=("parallel",)),
    )(x2d, w1t, b1, wdw9, b2, tap_mask)

    # concat([x1, x2], channel)[:, :oup]  (y2 was already sliced to oup-Cinit rows)
    y = jnp.concatenate([y1, y2], axis=0).reshape(oup, N, HWp)[:, :, :HW]
    return y.transpose(1, 0, 2).reshape(N, oup, H, W)


def make_params(key, inp, oup, ratio=2):
    """Deterministic synthetic parameters with BatchNorm folded into weights/bias.

    Returns (w1t, b1, wdw9, b2):
      w1t:  (Cinit, Cin)  primary 1x1 conv weight * BN scale  (torch: (Cinit, Cin, 1, 1))
      b1:   (Cinit, 1)    folded BN bias (primary branch)
      wdw9: (Cinit, 9)    depthwise 3x3 weight * BN scale      (torch: (Cinit, 1, 3, 3))
      b2:   (Cinit, 1)    folded BN bias (cheap branch)
    """
    init_channels = math.ceil(oup / ratio)
    ks = jax.random.split(key, 10)
    eps = 1e-5

    w1 = 0.1 * jax.random.normal(ks[0], (init_channels, inp), jnp.float32)
    g1 = jax.random.uniform(ks[1], (init_channels,), jnp.float32, 0.5, 1.5)
    be1 = 0.1 * jax.random.normal(ks[2], (init_channels,), jnp.float32)
    mu1 = 0.1 * jax.random.normal(ks[3], (init_channels,), jnp.float32)
    var1 = jax.random.uniform(ks[4], (init_channels,), jnp.float32, 0.5, 1.5)
    s1 = g1 / jnp.sqrt(var1 + eps)
    w1t = w1 * s1[:, None]
    b1 = (be1 - mu1 * s1).reshape(init_channels, 1)

    wdw = 0.1 * jax.random.normal(ks[5], (init_channels, 3, 3), jnp.float32)
    g2 = jax.random.uniform(ks[6], (init_channels,), jnp.float32, 0.5, 1.5)
    be2 = 0.1 * jax.random.normal(ks[7], (init_channels,), jnp.float32)
    mu2 = 0.1 * jax.random.normal(ks[8], (init_channels,), jnp.float32)
    var2 = jax.random.uniform(ks[9], (init_channels,), jnp.float32, 0.5, 1.5)
    s2 = g2 / jnp.sqrt(var2 + eps)
    wdw9 = (wdw * s2[:, None, None]).reshape(init_channels, 9)
    b2 = (be2 - mu2 * s2).reshape(init_channels, 1)

    return (w1t, b1, wdw9, b2)


def ghost_module_ref(x_nchw, params, oup):
    """Pure-JAX NCHW reference for correctness checking."""
    w1t, b1, wdw9, b2 = params
    N, Cin, H, W = x_nchw.shape
    Cinit = w1t.shape[0]
    x1 = jnp.einsum('oc,nchw->nohw', w1t, x_nchw) + b1.reshape(1, Cinit, 1, 1)
    x1 = jnp.where(x1 > 0, x1, 0.1 * x1)
    xp = jnp.pad(x1, ((0, 0), (0, 0), (1, 1), (1, 1)))
    wdw = wdw9.reshape(Cinit, 3, 3)
    x2 = jnp.zeros_like(x1)
    for di in range(3):
        for dj in range(3):
            x2 = x2 + xp[:, :, di:di + H, dj:dj + W] * wdw[:, di, dj].reshape(1, Cinit, 1, 1)
    x2 = x2 + b2.reshape(1, Cinit, 1, 1)
    x2 = jnp.where(x2 > 0, x2, 0.1 * x2)
    out = jnp.concatenate([x1, x2], axis=1)[:, :oup]
    return out


if __name__ == "__main__":
    # GhostModule(inp=4, oup=8, kernel_size=1, ratio=2, dw_size=3, stride=1, relu=True)
    N, Cin, H, W = 2, 4, 16, 16
    oup = 8

    key = jax.random.PRNGKey(0)
    kx, kp = jax.random.split(key)
    x = jax.random.normal(kx, (N, Cin, H, W), jnp.float32)
    params = make_params(kp, Cin, oup)

    out = ghost_module(x, params, oup)
    jax.block_until_ready(out)

    ref = ghost_module_ref(x, params, oup)
    assert out.shape == (N, oup, H, W), out.shape
    assert jnp.allclose(out, ref, atol=1e-4, rtol=1e-4), \
        float(jnp.max(jnp.abs(out - ref)))

    print("KERNEL_OK")
</pallas_src>

<mosaic_0001>
module attributes {stable_mosaic.version = 11 : i64} {
  func.func @ghost_kernel(%arg0: i32, %arg1: memref<4x256xf32, #tpu.memory_space<vmem>>, %arg2: memref<4x4xf32, #tpu.memory_space<vmem>>, %arg3: memref<4x1xf32, #tpu.memory_space<vmem>>, %arg4: memref<4x9xf32, #tpu.memory_space<vmem>>, %arg5: memref<4x1xf32, #tpu.memory_space<vmem>>, %arg6: memref<8x256xf32, #tpu.memory_space<vmem>>, %arg7: memref<4x256xf32, #tpu.memory_space<vmem>>, %arg8: memref<4x256xf32, #tpu.memory_space<vmem>>) attributes {dimension_semantics = [#tpu.dimension_semantics<parallel>], iteration_bounds = array<i64: 2>, scalar_prefetch = 0 : i64, scratch_operands = 0 : i64, tpu.core_type = #tpu.core_type<tc>, window_params = [{transform_indices = @transform_0, window_bounds = array<i64: 4, 256>}, {pipeline_mode = #tpu.pipeline_mode<synchronous>, transform_indices = @transform_1, window_bounds = array<i64: 4, 4>}, {pipeline_mode = #tpu.pipeline_mode<synchronous>, transform_indices = @transform_2, window_bounds = array<i64: 4, 1>}, {pipeline_mode = #tpu.pipeline_mode<synchronous>, transform_indices = @transform_3, window_bounds = array<i64: 4, 9>}, {pipeline_mode = #tpu.pipeline_mode<synchronous>, transform_indices = @transform_4, window_bounds = array<i64: 4, 1>}, {pipeline_mode = #tpu.pipeline_mode<synchronous>, transform_indices = @transform_5, window_bounds = array<i64: 8, 256>}, {transform_indices = @transform_6, window_bounds = array<i64: 4, 256>}, {transform_indices = @transform_7, window_bounds = array<i64: 4, 256>}]} {
    %c0 = arith.constant 0 : index
    %c0_0 = arith.constant 0 : index
    %0 = vector.load %arg1[%c0, %c0_0] : memref<4x256xf32, #tpu.memory_space<vmem>>, vector<4x256xf32>
    %c0_1 = arith.constant 0 : index
    %c0_2 = arith.constant 0 : index
    %1 = vector.load %arg2[%c0_1, %c0_2] : memref<4x4xf32, #tpu.memory_space<vmem>>, vector<4x4xf32>
    %cst = arith.constant dense<0.000000e+00> : vector<4x256xf32>
    %2 = tpu.matmul %1, %0, %cst {dimension_numbers = #tpu.dot_dimension_numbers<[1], [0], [0], [1], [0, 0, 1, 1], [], []>} : vector<4x4xf32>, vector<4x256xf32>, vector<4x256xf32> -> vector<4x256xf32>
    %c0_3 = arith.constant 0 : index
    %c0_4 = arith.constant 0 : index
    %3 = vector.load %arg3[%c0_3, %c0_4] : memref<4x1xf32, #tpu.memory_space<vmem>>, vector<4x1xf32>
    %4 = vector.broadcast %3 : vector<4x1xf32> to vector<4x256xf32>
    %5 = arith.addf %2, %4 : vector<4x256xf32>
    %cst_5 = arith.constant 1.000000e-01 : f32
    %6 = vector.broadcast %cst_5 : f32 to vector<4x256xf32>
    %7 = arith.mulf %6, %5 : vector<4x256xf32>
    %8 = arith.maximumf %5, %7 : vector<4x256xf32>
    %c0_6 = arith.constant 0 : index
    %c0_7 = arith.constant 0 : index
    %9 = vector.load %arg7[%c0_6, %c0_7] : memref<4x256xf32, #tpu.memory_space<vmem>>, vector<4x256xf32>
    tpu.vector_store %arg7[%c0_6, %c0_7], %8 {strides = array<i32>} : memref<4x256xf32, #tpu.memory_space<vmem>>, vector<4x256xf32>,
    %c0_8 = arith.constant 0 : index
    %c0_9 = arith.constant 0 : index
    %10 = vector.load %arg4[%c0_8, %c0_9] : memref<4x9xf32, #tpu.memory_space<vmem>>, vector<4x9xf32>
    %c0_10 = arith.constant 0 : index
    %c0_11 = arith.constant 0 : index
    %11 = vector.load %arg6[%c0_10, %c0_11] : memref<8x256xf32, #tpu.memory_space<vmem>>, vector<8x256xf32>
    %12 = vector.extract_strided_slice %10 {offsets = [0, 4], sizes = [4, 1], strides = [1, 1]} : vector<4x9xf32> to vector<4x1xf32>
    %13 = vector.broadcast %12 : vector<4x1xf32> to vector<4x256xf32>
    %14 = arith.mulf %13, %8 : vector<4x256xf32>
    %c17_i32 = arith.constant 17 : i32
    %15 = tpu.dynamic_rotate %8 by %c17_i32 dim 1 : vector<4x256xf32>, i32 -> vector<4x256xf32>
    %16 = vector.extract_strided_slice %11 {offsets = [0, 0], sizes = [1, 256], strides = [1, 1]} : vector<8x256xf32> to vector<1x256xf32>
    %17 = vector.broadcast %16 : vector<1x256xf32> to vector<4x256xf32>
    %18 = arith.mulf %15, %17 : vector<4x256xf32>
    %19 = vector.extract_strided_slice %10 {offsets = [0, 0], sizes = [4, 1], strides = [1, 1]} : vector<4x9xf32> to vector<4x1xf32>
    %20 = vector.broadcast %19 : vector<4x1xf32> to vector<4x256xf32>
    %21 = arith.mulf %20, %18 : vector<4x256xf32>
    %22 = arith.addf %14, %21 : vector<4x256xf32>
    %c16_i32 = arith.constant 16 : i32
    %23 = tpu.dynamic_rotate %8 by %c16_i32 dim 1 : vector<4x256xf32>, i32 -> vector<4x256xf32>
    %24 = vector.extract_strided_slice %11 {offsets = [1, 0], sizes = [1, 256], strides = [1, 1]} : vector<8x256xf32> to vector<1x256xf32>
    %25 = vector.broadcast %24 : vector<1x256xf32> to vector<4x256xf32>
    %26 = arith.mulf %23, %25 : vector<4x256xf32>
    %27 = vector.extract_strided_slice %10 {offsets = [0, 1], sizes = [4, 1], strides = [1, 1]} : vector<4x9xf32> to vector<4x1xf32>
    %28 = vector.broadcast %27 : vector<4x1xf32> to vector<4x256xf32>
    %29 = arith.mulf %28, %26 : vector<4x256xf32>
    %30 = arith.addf %22, %29 : vector<4x256xf32>
    %c15_i32 = arith.constant 15 : i32
    %31 = tpu.dynamic_rotate %8 by %c15_i32 dim 1 : vector<4x256xf32>, i32 -> vector<4x256xf32>
    %32 = vector.extract_strided_slice %11 {offsets = [2, 0], sizes = [1, 256], strides = [1, 1]} : vector<8x256xf32> to vector<1x256xf32>
    %33 = vector.broadcast %32 : vector<1x256xf32> to vector<4x256xf32>
    %34 = arith.mulf %31, %33 : vector<4x256xf32>
    %35 = vector.extract_strided_slice %10 {offsets = [0, 2], sizes = [4, 1], strides = [1, 1]} : vector<4x9xf32> to vector<4x1xf32>
    %36 = vector.broadcast %35 : vector<4x1xf32> to vector<4x256xf32>
    %37 = arith.mulf %36, %34 : vector<4x256xf32>
    %38 = arith.addf %30, %37 : vector<4x256xf32>
    %c1_i32 = arith.constant 1 : i32
    %39 = tpu.dynamic_rotate %8 by %c1_i32 dim 1 : vector<4x256xf32>, i32 -> vector<4x256xf32>
    %40 = vector.extract_strided_slice %11 {offsets = [3, 0], sizes = [1, 256], strides = [1, 1]} : vector<8x256xf32> to vector<1x256xf32>
    %41 = vector.broadcast %40 : vector<1x256xf32> to vector<4x256xf32>
    %42 = arith.mulf %39, %41 : vector<4x256xf32>
    %43 = vector.extract_strided_slice %10 {offsets = [0, 3], sizes = [4, 1], strides = [1, 1]} : vector<4x9xf32> to vector<4x1xf32>
    %44 = vector.broadcast %43 : vector<4x1xf32> to vector<4x256xf32>
    %45 = arith.mulf %44, %42 : vector<4x256xf32>
    %46 = arith.addf %38, %45 : vector<4x256xf32>
    %c255_i32 = arith.constant 255 : i32
    %47 = tpu.dynamic_rotate %8 by %c255_i32 dim 1 : vector<4x256xf32>, i32 -> vector<4x256xf32>
    %48 = vector.extract_strided_slice %11 {offsets = [4, 0], sizes = [1, 256], strides = [1, 1]} : vector<8x256xf32> to vector<1x256xf32>
    %49 = vector.broadcast %48 : vector<1x256xf32> to vector<4x256xf32>
    %50 = arith.mulf %47, %49 : vector<4x256xf32>
    %51 = vector.extract_strided_slice %10 {offsets = [0, 5], sizes = [4, 1], strides = [1, 1]} : vector<4x9xf32> to vector<4x1xf32>
    %52 = vector.broadcast %51 : vector<4x1xf32> to vector<4x256xf32>
    %53 = arith.mulf %52, %50 : vector<4x256xf32>
    %54 = arith.addf %46, %53 : vector<4x256xf32>
    %c241_i32 = arith.constant 241 : i32
    %55 = tpu.dynamic_rotate %8 by %c241_i32 dim 1 : vector<4x256xf32>, i32 -> vector<4x256xf32>
    %56 = vector.extract_strided_slice %11 {offsets = [5, 0], sizes = [1, 256], strides = [1, 1]} : vector<8x256xf32> to vector<1x256xf32>
    %57 = vector.broadcast %56 : vector<1x256xf32> to vector<4x256xf32>
    %58 = arith.mulf %55, %57 : vector<4x256xf32>
    %59 = vector.extract_strided_slice %10 {offsets = [0, 6], sizes = [4, 1], strides = [1, 1]} : vector<4x9xf32> to vector<4x1xf32>
    %60 = vector.broadcast %59 : vector<4x1xf32> to vector<4x256xf32>
    %61 = arith.mulf %60, %58 : vector<4x256xf32>
    %62 = arith.addf %54, %61 : vector<4x256xf32>
    %c240_i32 = arith.constant 240 : i32
    %63 = tpu.dynamic_rotate %8 by %c240_i32 dim 1 : vector<4x256xf32>, i32 -> vector<4x256xf32>
    %64 = vector.extract_strided_slice %11 {offsets = [6, 0], sizes = [1, 256], strides = [1, 1]} : vector<8x256xf32> to vector<1x256xf32>
    %65 = vector.broadcast %64 : vector<1x256xf32> to vector<4x256xf32>
    %66 = arith.mulf %63, %65 : vector<4x256xf32>
    %67 = vector.extract_strided_slice %10 {offsets = [0, 7], sizes = [4, 1], strides = [1, 1]} : vector<4x9xf32> to vector<4x1xf32>
    %68 = vector.broadcast %67 : vector<4x1xf32> to vector<4x256xf32>
    %69 = arith.mulf %68, %66 : vector<4x256xf32>
    %70 = arith.addf %62, %69 : vector<4x256xf32>
    %c239_i32 = arith.constant 239 : i32
    %71 = tpu.dynamic_rotate %8 by %c239_i32 dim 1 : vector<4x256xf32>, i32 -> vector<4x256xf32>
    %72 = vector.extract_strided_slice %11 {offsets = [7, 0], sizes = [1, 256], strides = [1, 1]} : vector<8x256xf32> to vector<1x256xf32>
    %73 = vector.broadcast %72 : vector<1x256xf32> to vector<4x256xf32>
    %74 = arith.mulf %71, %73 : vector<4x256xf32>
    %75 = vector.extract_strided_slice %10 {offsets = [0, 8], sizes = [4, 1], strides = [1, 1]} : vector<4x9xf32> to vector<4x1xf32>
    %76 = vector.broadcast %75 : vector<4x1xf32> to vector<4x256xf32>
    %77 = arith.mulf %76, %74 : vector<4x256xf32>
    %78 = arith.addf %70, %77 : vector<4x256xf32>
    %c0_12 = arith.constant 0 : index
    %c0_13 = arith.constant 0 : index
    %79 = vector.load %arg5[%c0_12, %c0_13] : memref<4x1xf32, #tpu.memory_space<vmem>>, vector<4x1xf32>
    %80 = vector.broadcast %79 : vector<4x1xf32> to vector<4x256xf32>
    %81 = arith.addf %78, %80 : vector<4x256xf32>
    %cst_14 = arith.constant 1.000000e-01 : f32
    %82 = vector.broadcast %cst_14 : f32 to vector<4x256xf32>
    %83 = arith.mulf %82, %81 : vector<4x256xf32>
    %84 = arith.maximumf %81, %83 : vector<4x256xf32>
    %c0_15 = arith.constant 0 : index
    %c0_16 = arith.constant 0 : index
    %85 = vector.load %arg8[%c0_15, %c0_16] : memref<4x256xf32, #tpu.memory_space<vmem>>, vector<4x256xf32>
    tpu.vector_store %arg8[%c0_15, %c0_16], %84 {strides = array<i32>} : memref<4x256xf32, #tpu.memory_space<vmem>>, vector<4x256xf32>,
    return
  }
  func.func @transform_0(%arg0: i32) -> (i32, i32) {
    %c0_i32 = arith.constant 0 : i32
    %c0_i32_0 = arith.constant 0 : i32
    return %c0_i32, %arg0 : i32, i32
  }
  func.func @transform_1(%arg0: i32) -> (i32, i32) {
    %c0_i32 = arith.constant 0 : i32
    %c0_i32_0 = arith.constant 0 : i32
    %c0_i32_1 = arith.constant 0 : i32
    return %c0_i32, %c0_i32_0 : i32, i32
  }
  func.func @transform_2(%arg0: i32) -> (i32, i32) {
    %c0_i32 = arith.constant 0 : i32
    %c0_i32_0 = arith.constant 0 : i32
    %c0_i32_1 = arith.constant 0 : i32
    return %c0_i32, %c0_i32_0 : i32, i32
  }
  func.func @transform_3(%arg0: i32) -> (i32, i32) {
    %c0_i32 = arith.constant 0 : i32
    %c0_i32_0 = arith.constant 0 : i32
    %c0_i32_1 = arith.constant 0 : i32
    return %c0_i32, %c0_i32_0 : i32, i32
  }
  func.func @transform_4(%arg0: i32) -> (i32, i32) {
    %c0_i32 = arith.constant 0 : i32
    %c0_i32_0 = arith.constant 0 : i32
    %c0_i32_1 = arith.constant 0 : i32
    return %c0_i32, %c0_i32_0 : i32, i32
  }
  func.func @transform_5(%arg0: i32) -> (i32, i32) {
    %c0_i32 = arith.constant 0 : i32
    %c0_i32_0 = arith.constant 0 : i32
    %c0_i32_1 = arith.constant 0 : i32
    return %c0_i32, %c0_i32_0 : i32, i32
  }
  func.func @transform_6(%arg0: i32) -> (i32, i32) {
    %c0_i32 = arith.constant 0 : i32
    %c0_i32_0 = arith.constant 0 : i32
    return %c0_i32, %arg0 : i32, i32
  }
  func.func @transform_7(%arg0: i32) -> (i32, i32) {
    %c0_i32 = arith.constant 0 : i32
    %c0_i32_0 = arith.constant 0 : i32
    return %c0_i32, %arg0 : i32, i32
  }
}

</mosaic_0001>

<llo_original>
// kernel: tpu_custom_call.1
$region0: #{tpu_custom_call.1}
  #allocation0 [shape = 'u32[]', space=smem, size = 0x4, offset = 0x4, fixed_abs, tag = 'smem constant byte address 0x4 - core index']
  #allocation1 [shape = 'u32[144,128]{1,0:T(1,128)}', space=vmem, size = 0x12000, scoped, tag = 'internal scratch']
  %s0 = inlined_call_operand.hbm [shape: f32[4,512], index: 0, kind: input, shape index: {}]
  %s1 = inlined_call_operand.vmem [shape: f32[4,4], index: 1, kind: input, shape index: {}]
  %s2 = inlined_call_operand.vmem [shape: f32[4,1], index: 2, kind: input, shape index: {}]
  %s3 = inlined_call_operand.vmem [shape: f32[4,9], index: 3, kind: input, shape index: {}]
  %s4 = inlined_call_operand.vmem [shape: f32[4,1], index: 4, kind: input, shape index: {}]
  %s5 = inlined_call_operand.vmem [shape: f32[8,256], index: 5, kind: input, shape index: {}]
  %s6 = inlined_call_operand.hbm [shape: f32[4,512], index: 6, kind: output, shape index: {0}]
  %s7 = inlined_call_operand.hbm [shape: f32[4,512], index: 7, kind: output, shape index: {1}]
  %8 = xla_tuple %s6, %s7
  %s9 = sld [smem:[#allocation0]]
  $region69: #{tpu_custom_call.1} parent=0
    _
  %s11 = ssub.s32 1, %s9
  %s12 = scalar_select 0, %s11, %s9
  $region1: #{tpu_custom_call.1} parent=0
    #allocation2 [shape = 'u8[8192]{0}', space=vmem, size = 0x2000, scoped, tag = 'input window, operand 0']
    #allocation3 [shape = 's32[2]{0}', space=sflag, size = 0x8, scoped, tag = 'scoped memory for tpu_custom_call.1']
    #allocation4 [shape = 's32[2]{0}', space=sflag, size = 0x8, scoped, tag = 'scoped memory for tpu_custom_call.1']
    #allocation5 [shape = 'u8[8192]{0}', space=vmem, size = 0x2000, scoped, tag = 'output window, operand 0']
    #allocation6 [shape = 'u8[8192]{0}', space=vmem, size = 0x2000, scoped, tag = 'output window, operand 1']
    #allocation7 [shape = 's32[2]{0}', space=sflag, size = 0x8, scoped, tag = 'scoped memory for tpu_custom_call.1']
    %13 = vsyncpa [#allocation3], 0
    %s14 = scalar_lea.sflag [#allocation3], 1
    %15 = vsyncpa %s14, 0
    %16 = vsyncpa [#allocation4], 0
    %s17 = scalar_lea.sflag [#allocation4], 1
    %18 = vsyncpa %s17, 0
    %19 = vsyncpa [#allocation7], 0
    %s20 = scalar_lea.sflag [#allocation7], 1
    %21 = vsyncpa %s20, 0
    loop: start=0, step=1, limit=4
    $region2: #{tpu_custom_call.1} parent=1 // loop_pre_header
      _
    $region3: #{tpu_custom_call.1} parent=1 // loop_header
      %s23 = sphi 0, %s27
      %p24 = scmp.ge.s32.totalorder %s23, 4
      %s33 = sphi 0, %s35
      %s36 = sphi 0, %s33
      %s37 = sphi 0, %s36
      %s53 = sphi 0, %s37
      %s57 = sphi 0, %s57
      %s59 = sphi 0, %s57
      %s60 = sphi 0, %s59
      %s74 = sphi 0, %s60
      %s78 = sphi 0, %s78
      %s80 = sphi 0, %s78
      %s81 = sphi 0, %s80
      %s95 = sphi 0, %s81
      %s99 = sphi 0, %s99
      %s101 = sphi 0, %s99
      %s102 = sphi 0, %s101
      %s116 = sphi 0, %s102
      %s120 = sphi 0, %s120
      %s122 = sphi 0, %s120
      %s123 = sphi 0, %s122
      %s137 = sphi 0, %s123
      %s141 = sphi 0, %s141
      %s143 = sphi 0, %s141
      %s144 = sphi 0, %s143
      %s158 = sphi 0, %s144
      %s164 = sphi 0, %s166
      %s167 = sphi 0, %s164
      %s168 = sphi 0, %s167
      %s184 = sphi 0, %s168
      %s190 = sphi 0, %s192
      %s193 = sphi 0, %s190
      %s194 = sphi 0, %s193
      %s210 = sphi 0, %s194
    $region4: #{tpu_custom_call.1} parent=1 // loop_header_branch
      %26 = sbr.rel (%p24) target = $region8
    $region5: #{tpu_custom_call.1} parent=1 // loop_body
      %s28 = ssub.s32 %s23, 1
      %s29 = ssub.s32 %s23, 2
      %s30 = sadd.s32 %s23, 1
      %s31 = ssub.s32 %s23, %s30
      %p32 = scmp.eq.s32.totalorder %s31, 0
      %s34 = sadd.s32 %s33, 1
      %s35 = scalar_select %p32, %s33, %s34
      %p38 = pneg %p32
      %p39 = scmp.eq.s32.totalorder %s23, 1
      %p40 = por %p38, %p39
      %p41 = scmp.ne.s32.totalorder %s33, %s36
      %p42 = scmp.eq.s32.totalorder %s23, 0
      %p43 = por %p41, %p42
      %p44 = scmp.ne.s32.totalorder %s33, %s36
      %p45 = scmp.eq.s32.totalorder %s28, 1
      %p46 = por %p44, %p45
      %p47 = scmp.ne.s32.totalorder %s36, %s37
      %p48 = scmp.eq.s32.totalorder %s28, 0
      %p49 = por %p47, %p48
      %p50 = scmp.ne.s32.totalorder %s36, %s37
      %p51 = scmp.eq.s32.totalorder %s29, 1
      %p52 = por %p50, %p51
      %p54 = scmp.ne.s32.totalorder %s37, %s53
      %p55 = scmp.eq.s32.totalorder %s29, 0
      %p56 = por %p54, %p55
      %s58 = sadd.s32 %s57, 1
      %p61 = scmp.eq.s32.totalorder %s23, 1
      %p62 = scmp.ne.s32.totalorder %s57, %s59
      %p63 = scmp.eq.s32.totalorder %s23, 0
      %p64 = por %p62, %p63
      %p65 = scmp.ne.s32.totalorder %s57, %s59
      %p66 = scmp.eq.s32.totalorder %s28, 1
      %p67 = por %p65, %p66
      %p68 = scmp.ne.s32.totalorder %s59, %s60
      %p69 = scmp.eq.s32.totalorder %s28, 0
      %p70 = por %p68, %p69
      %p71 = scmp.ne.s32.totalorder %s59, %s60
      %p72 = scmp.eq.s32.totalorder %s29, 1
      %p73 = por %p71, %p72
      %p75 = scmp.ne.s32.totalorder %s60, %s74
      %p76 = scmp.eq.s32.totalorder %s29, 0
      %p77 = por %p75, %p76
      %s79 = sadd.s32 %s78, 1
      %p82 = scmp.eq.s32.totalorder %s23, 1
      %p83 = scmp.ne.s32.totalorder %s78, %s80
      %p84 = scmp.eq.s32.totalorder %s23, 0
      %p85 = por %p83, %p84
      %p86 = scmp.ne.s32.totalorder %s78, %s80
      %p87 = scmp.eq.s32.totalorder %s28, 1
      %p88 = por %p86, %p87
      %p89 = scmp.ne.s32.totalorder %s80, %s81
      %p90 = scmp.eq.s32.totalorder %s28, 0
      %p91 = por %p89, %p90
      %p92 = scmp.ne.s32.totalorder %s80, %s81
      %p93 = scmp.eq.s32.totalorder %s29, 1
      %p94 = por %p92, %p93
      %p96 = scmp.ne.s32.totalorder %s81, %s95
      %p97 = scmp.eq.s32.totalorder %s29, 0
      %p98 = por %p96, %p97
      %s100 = sadd.s32 %s99, 1
      %p103 = scmp.eq.s32.totalorder %s23, 1
      %p104 = scmp.ne.s32.totalorder %s99, %s101
      %p105 = scmp.eq.s32.totalorder %s23, 0
      %p106 = por %p104, %p105
      %p107 = scmp.ne.s32.totalorder %s99, %s101
      %p108 = scmp.eq.s32.totalorder %s28, 1
      %p109 = por %p107, %p108
      %p110 = scmp.ne.s32.totalorder %s101, %s102
      %p111 = scmp.eq.s32.totalorder %s28, 0
      %p112 = por %p110, %p111
      %p113 = scmp.ne.s32.totalorder %s101, %s102
      %p114 = scmp.eq.s32.totalorder %s29, 1
      %p115 = por %p113, %p114
      %p117 = scmp.ne.s32.totalorder %s102, %s116
      %p118 = scmp.eq.s32.totalorder %s29, 0
      %p119 = por %p117, %p118
      %s121 = sadd.s32 %s120, 1
      %p124 = scmp.eq.s32.totalorder %s23, 1
      %p125 = scmp.ne.s32.totalorder %s120, %s122
      %p126 = scmp.eq.s32.totalorder %s23, 0
      %p127 = por %p125, %p126
      %p128 = scmp.ne.s32.totalorder %s120, %s122
      %p129 = scmp.eq.s32.totalorder %s28, 1
      %p130 = por %p128, %p129
      %p131 = scmp.ne.s32.totalorder %s122, %s123
      %p132 = scmp.eq.s32.totalorder %s28, 0
      %p133 = por %p131, %p132
      %p134 = scmp.ne.s32.totalorder %s122, %s123
      %p135 = scmp.eq.s32.totalorder %s29, 1
      %p136 = por %p134, %p135
      %p138 = scmp.ne.s32.totalorder %s123, %s137
      %p139 = scmp.eq.s32.totalorder %s29, 0
      %p140 = por %p138, %p139
      %s142 = sadd.s32 %s141, 1
      %p145 = scmp.eq.s32.totalorder %s23, 1
      %p146 = scmp.ne.s32.totalorder %s141, %s143
      %p147 = scmp.eq.s32.totalorder %s23, 0
      %p148 = por %p146, %p147
      %p149 = scmp.ne.s32.totalorder %s141, %s143
      %p150 = scmp.eq.s32.totalorder %s28, 1
      %p151 = por %p149, %p150
      %p152 = scmp.ne.s32.totalorder %s143, %s144
      %p153 = scmp.eq.s32.totalorder %s28, 0
      %p154 = por %p152, %p153
      %p155 = scmp.ne.s32.totalorder %s143, %s144
      %p156 = scmp.eq.s32.totalorder %s29, 1
      %p157 = por %p155, %p156
      %p159 = scmp.ne.s32.totalorder %s144, %s158
      %p160 = scmp.eq.s32.totalorder %s29, 0
      %p161 = por %p159, %p160
      %s162 = ssub.s32 %s23, %s30
      %p163 = scmp.eq.s32.totalorder %s162, 0
      %s165 = sadd.s32 %s164, 1
      %s166 = scalar_select %p163, %s164, %s165
      %p169 = pneg %p163
      %p170 = scmp.eq.s32.totalorder %s23, 1
      %p171 = por %p169, %p170
      %p172 = scmp.ne.s32.totalorder %s164, %s167
      %p173 = scmp.eq.s32.totalorder %s23, 0
      %p174 = por %p172, %p173
      %p175 = scmp.ne.s32.totalorder %s164, %s167
      %p176 = scmp.eq.s32.totalorder %s28, 1
      %p177 = por %p175, %p176
      %p178 = scmp.ne.s32.totalorder %s167, %s168
      %p179 = scmp.eq.s32.totalorder %s28, 0
      %p180 = por %p178, %p179
      %p181 = scmp.ne.s32.totalorder %s167, %s168
      %p182 = scmp.eq.s32.totalorder %s29, 1
      %p183 = por %p181, %p182
      %p185 = scmp.ne.s32.totalorder %s168, %s184
      %p186 = scmp.eq.s32.totalorder %s29, 0
      %p187 = por %p185, %p186
      %s188 = ssub.s32 %s23, %s30
      %p189 = scmp.eq.s32.totalorder %s188, 0
      %s191 = sadd.s32 %s190, 1
      %s192 = scalar_select %p189, %s190, %s191
      %p195 = pneg %p189
      %p196 = scmp.eq.s32.totalorder %s23, 1
      %p197 = por %p195, %p196
      %p198 = scmp.ne.s32.totalorder %s190, %s193
      %p199 = scmp.eq.s32.totalorder %s23, 0
      %p200 = por %p198, %p199
      %p201 = scmp.ne.s32.totalorder %s190, %s193
      %p202 = scmp.eq.s32.totalorder %s28, 1
      %p203 = por %p201, %p202
      %p204 = scmp.ne.s32.totalorder %s193, %s194
      %p205 = scmp.eq.s32.totalorder %s28, 0
      %p206 = por %p204, %p205
      %p207 = scmp.ne.s32.totalorder %s193, %s194
      %p208 = scmp.eq.s32.totalorder %s29, 1
      %p209 = por %p207, %p208
      %p211 = scmp.ne.s32.totalorder %s194, %s210
      %p212 = scmp.eq.s32.totalorder %s29, 0
      %p213 = por %p211, %p212
      %p214 = scmp.le.s32.totalorder 1, %s23
      %p215 = scmp.lt.s32.totalorder %s23, 3
      %p216 = pnand %p214, %p215
      %p217 = pneg %p216
      // Predicated region
      $region9: #{tpu_custom_call.1} parent=5 // pred_check
        _
      $region10: #{tpu_custom_call.1} parent=5 // pred_check_branch
        %219 = sbr.rel (%p216) target = $region12
      $region11: #{tpu_custom_call.1} parent=5 // pred_region
        %s220 = ssub.s32 %s23, 1
        // Predicated region
        $region13: #{tpu_custom_call.1} parent=11 // pred_check
          %p221 = pneg %p70
        $region14: #{tpu_custom_call.1} parent=11 // pred_check_branch
          %223 = sbr.rel (%p221) target = $region16
        $region15: #{tpu_custom_call.1} parent=11 // pred_region
          _
        $region16: #{tpu_custom_call.1} parent=11 // pred_fallthru
          _
        // Predicated region
        $region17: #{tpu_custom_call.1} parent=11 // pred_check
          %p224 = pneg %p91
        $region18: #{tpu_custom_call.1} parent=11 // pred_check_branch
          %226 = sbr.rel (%p224) target = $region20
        $region19: #{tpu_custom_call.1} parent=11 // pred_region
          _
        $region20: #{tpu_custom_call.1} parent=11 // pred_fallthru
          _
        // Predicated region
        $region21: #{tpu_custom_call.1} parent=11 // pred_check
          %p227 = pneg %p112
        $region22: #{tpu_custom_call.1} parent=11 // pred_check_branch
          %229 = sbr.rel (%p227) target = $region24
        $region23: #{tpu_custom_call.1} parent=11 // pred_region
          _
        $region24: #{tpu_custom_call.1} parent=11 // pred_fallthru
          _
        // Predicated region
        $region25: #{tpu_custom_call.1} parent=11 // pred_check
          %p230 = pneg %p133
        $region26: #{tpu_custom_call.1} parent=11 // pred_check_branch
          %232 = sbr.rel (%p230) target = $region28
        $region27: #{tpu_custom_call.1} parent=11 // pred_region
          _
        $region28: #{tpu_custom_call.1} parent=11 // pred_fallthru
          _
        // Predicated region
        $region29: #{tpu_custom_call.1} parent=11 // pred_check
          %p233 = pneg %p154
        $region30: #{tpu_custom_call.1} parent=11 // pred_check_branch
          %235 = sbr.rel (%p233) target = $region32
        $region31: #{tpu_custom_call.1} parent=11 // pred_region
          _
        $region32: #{tpu_custom_call.1} parent=11 // pred_fallthru
          _
      $region12: #{tpu_custom_call.1} parent=5 // pred_fallthru
        _
      %p236 = scmp.lt.s32.totalorder %s23, 2
      // Predicated region
      $region33: #{tpu_custom_call.1} parent=5 // pred_check
        %p237 = pneg %p236
      $region34: #{tpu_custom_call.1} parent=5 // pred_check_branch
        %239 = sbr.rel (%p237) target = $region36
      $region35: #{tpu_custom_call.1} parent=5 // pred_region
        // Predicated region
        $region37: #{tpu_custom_call.1} parent=35 // pred_check
          %p240 = pneg %p43
        $region38: #{tpu_custom_call.1} parent=35 // pred_check_branch
          %242 = sbr.rel (%p240) target = $region40
        $region39: #{tpu_custom_call.1} parent=35 // pred_region
          %s243 = sand.u32 %s33, 1
          %s244 = scalar_lea.sflag [#allocation3], %s243
          %s245 = sand.u32 %s33, 1
          %s246 = smul.addr %s245, 8
          %s247 = scalar_lea.vmem [#allocation2], %s246
          %s248 = smul.u32 2, %s23
          %s250 = ssub.s32 128, 128
          %251 = vsyncadd %s244, %s250
          %s252 = smul.addr %s248, 64
          %s253 = scalar_lea.hbm %s0, %s252
          %s255 = sshll.u32 %s247, 4
          %s256 = int_to_ptr.vmem [resolvable:$true] %s255
          %258 = dma.hbm_to_vmem [thread:$0]  %s253, 128, %s256, %s244
        $region40: #{tpu_custom_call.1} parent=35 // pred_fallthru
          _
      $region36: #{tpu_custom_call.1} parent=5 // pred_fallthru
        _
      %p259 = scmp.le.s32.totalorder 1, %s23
      %p260 = scmp.lt.s32.totalorder %s23, 3
      %p261 = pnand %p259, %p260
      %p262 = pneg %p261
      // Predicated region
      $region41: #{tpu_custom_call.1} parent=5 // pred_check
        _
      $region42: #{tpu_custom_call.1} parent=5 // pred_check_branch
        %264 = sbr.rel (%p261) target = $region44
      $region43: #{tpu_custom_call.1} parent=5 // pred_region
        %s265 = ssub.s32 %s23, 1
        %s266 = sand.u32 %s36, 1
        %s267 = scalar_lea.sflag [#allocation3], %s266
        %s268 = sand.u32 %s36, 1
        %s269 = smul.addr %s268, 8
        %s270 = scalar_lea.vmem [#allocation2], %s269
        // Predicated region
        $region45: #{tpu_custom_call.1} parent=43 // pred_check
          %p271 = pneg %p49
        $region46: #{tpu_custom_call.1} parent=43 // pred_check_branch
          %273 = sbr.rel (%p271) target = $region48
        $region47: #{tpu_custom_call.1} parent=43 // pred_region
          %274 = dma.done %s267, 128
        $region48: #{tpu_custom_call.1} parent=43 // pred_fallthru
          _
        %s275 = sand.u32 %s36, 1
        %s276 = scalar_lea.sflag [#allocation3], %s275
        %s277 = sand.u32 %s36, 1
        %s278 = smul.addr %s277, 8
        %s279 = scalar_lea.vmem [#allocation2], %s278
        %p280 = pneg %p49
        %p281 = pneg %p46
        %p282 = pneg %p70
        %p283 = pneg %p67
        %p284 = pneg %p91
        %p285 = pneg %p88
        %p286 = pneg %p112
        %p287 = pneg %p109
        %p288 = pneg %p133
        %p289 = pneg %p130
        %p290 = pneg %p154
        %p291 = pneg %p151
        %p292 = pneg %p180
        %p293 = pneg %p177
        %s294 = sand.u32 %s167, 1
        %s295 = scalar_lea.sflag [#allocation4], %s294
        %s296 = sand.u32 %s167, 1
        %s297 = smul.addr %s296, 8
        %s298 = scalar_lea.vmem [#allocation5], %s297
        %p299 = pneg %p206
        %p300 = pneg %p203
        %s301 = sand.u32 %s193, 1
        %s302 = scalar_lea.sflag [#allocation7], %s301
        %s303 = sand.u32 %s193, 1
        %s304 = smul.addr %s303, 8
        %s305 = scalar_lea.vmem [#allocation6], %s304
        %s306 = smul.u32 2, %s28
        %s307 = smul.u32 2, %s28
        %s308 = smul.u32 2, %s28
        %v309 = vld [vmem:[%s270] sm:$0xff]
        %v310 = vld [vmem:[%s1] sm:$0xf]
        %v311 = vld [vmem:[%s2] sm:$0xf]
        %313 = vset.pattern.permute.xlu0 0
        %314 = vperm.xlu0 %313, %v311
        %v315 = vpop.permute.xlu0 %314
        %v318 = vcombine.high %v309, %v309
        %vm319 = vcmask 31744
        %v321 = vsel %vm319, %v310, 0
        %vm323 = vcmask 1043456
        %v324 = vsel %vm323, %v309, 0
        %v326 = vsel %vm323, %v318, 0
        %328 = vmatprep.subr.mxu0 %v326
        %329 = vmatpush1.msra.mxu0 %v324
        %330 = vmatprep.subr.mxu0 0.0
        %331 = vmatpush1.msra.mxu0 0.0
        %332 = vmatprep.subr.mxu0 0.0
        %333 = vmatpush1.msra.mxu0 0.0
        %334 = vmatprep.subr.mxu0 0.0
        %335 = vmatpush1.msra.mxu0 0.0
        %336 = vmatprep.subr.mxu0 0.0
        %337 = vmatpush1.msra.mxu0 0.0
        %338 = vmatprep.subr.mxu0 0.0
        %339 = vmatpush1.msra.mxu0 0.0
        %340 = vmatprep.subr.mxu0 0.0
        %341 = vmatpush1.msra.mxu0 0.0
        %342 = vmatprep.subr.mxu0 0.0
        %343 = vmatpush1.msra.mxu0 0.0
        %344 = vmatprep.subr.mxu0 0.0
        %345 = vmatpush1.msra.mxu0 0.0
        %346 = vmatprep.subr.mxu0 0.0
        %347 = vmatpush1.msra.mxu0 0.0
        %348 = vmatprep.subr.mxu0 0.0
        %349 = vmatpush1.msra.mxu0 0.0
        %350 = vmatprep.subr.mxu0 0.0
        %351 = vmatpush1.msra.mxu0 0.0
        %352 = vmatprep.subr.mxu0 0.0
        %353 = vmatpush1.msra.mxu0 0.0
        %354 = vmatprep.subr.mxu0 0.0
        %355 = vmatpush1.msra.mxu0 0.0
        %356 = vmatprep.subr.mxu0 0.0
        %357 = vmatpush1.msra.mxu0 0.0
        %358 = vmatprep.subr.mxu0 0.0
        %359 = vmatpush1.msra.mxu0 0.0
        %360 = vmatprep.subr.mxu0 0.0
        %361 = vmatpush1.msra.mxu0 0.0
        %362 = vmatprep.subr.mxu0 0.0
        %363 = vmatpush1.msra.mxu0 0.0
        %364 = vmatprep.subr.mxu0 0.0
        %365 = vmatpush1.msra.mxu0 0.0
        %366 = vmatprep.subr.mxu0 0.0
        %367 = vmatpush1.msra.mxu0 0.0
        %368 = vmatprep.subr.mxu0 0.0
        %369 = vmatpush1.msra.mxu0 0.0
        %370 = vmatprep.subr.mxu0 0.0
        %371 = vmatpush1.msra.mxu0 0.0
        %372 = vmatprep.subr.mxu0 0.0
        %373 = vmatpush1.msra.mxu0 0.0
        %374 = vmatprep.subr.mxu0 0.0
        %375 = vmatpush1.msra.mxu0 0.0
        %376 = vmatprep.subr.mxu0 0.0
        %377 = vmatpush1.msra.mxu0 0.0
        %378 = vmatprep.subr.mxu0 0.0
        %379 = vmatpush1.msra.mxu0 0.0
        %380 = vmatprep.subr.mxu0 0.0
        %381 = vmatpush1.msra.mxu0 0.0
        %382 = vmatprep.subr.mxu0 0.0
        %383 = vmatpush1.msra.mxu0 0.0
        %384 = vmatprep.subr.mxu0 0.0
        %385 = vmatpush1.msra.mxu0 0.0
        %386 = vmatprep.subr.mxu0 0.0
        %387 = vmatpush1.msra.mxu0 0.0
        %388 = vmatprep.subr.mxu0 0.0
        %389 = vmatpush1.msra.mxu0 0.0
        %390 = vmatprep.subr.mxu0 0.0
        %391 = vmatpush1.msra.mxu0 0.0
        %392 = vmatprep.mubr.f32.mxu0 0.0
        %393 = vmatmul.mubr.f32.gmra.mrb[0].mxu0 %v321
        %v394 = vpop.f32.mrb[0].mxu0
        %v395 = vadd.f32 %v315, %v394
        %v396 = vpop.f32.mrb[0].mxu0
        %v397 = vadd.f32 %v315, %v396
        %398 = vdwg.mxu0
        %v399 = vmul.f32 %v395, 0.1
        %v400 = vmul.f32 %v397, 0.1
        %v401 = vmax.f32 %v395, %v399
        %v402 = vmax.f32 %v397, %v400
        %v405 = vcombine.low %v401, %v402
        %407 = vst [vmem:[%s298] sm:$0xff] %v405
        %v408 = vld [vmem:[%s3] sm:$0xf]
        %v409 = vld [vmem:[%s5] sm:$0xff]
        %v410 = vld [vmem:[%s5 + $0x8] sm:$0xff]
        %412 = vset.pattern.permute.xlu0 4
        %413 = vperm.xlu0 %412, %v408
        %v414 = vpop.permute.xlu0 %413
        %v416 = vmul.f32 %v414, %v401
        %v417 = vmul.f32 %v414, %v402
        %418 = vrot.lane.b32.xlu0 %v401, 17
        %v419 = vpop.permute.xlu0 %418
        %420 = vrot.lane.b32.xlu0 %v402, 17
        %v421 = vpop.permute.xlu0 %420
        %v422 = vlaneseq
        %v423 = vand.u32 %v422, 127
        %vm424 = vcmp.lt.s32.totalorder %v423, 17
        %v425 = vsel %vm424, %v419, %v421
        %v426 = vsel %vm424, %v421, %v419
        %v427 = vlaneseq
        %v428 = vshrl.u32 %v427, 7
        %v429 = vsub.s32 0, %v428
        %v430 = vrot.slane %v409, %v429
        %v431 = vlaneseq
        %v432 = vshrl.u32 %v431, 7
        %v433 = vsub.s32 0, %v432
        %v434 = vrot.slane %v410, %v433
        %v435 = vmul.f32 %v426, %v430
        %v436 = vmul.f32 %v425, %v434
        %437 = vset.pattern.permute.xlu0 0
        %438 = vperm.xlu0 %437, %v408
        %v439 = vpop.permute.xlu0 %438
        %v441 = vmul.f32 %v439, %v435
        %v442 = vmul.f32 %v439, %v436
        %v443 = vadd.f32 %v416, %v441
        %v444 = vadd.f32 %v417, %v442
        %445 = vrot.lane.b32.xlu0 %v401, 16
        %v446 = vpop.permute.xlu0 %445
        %447 = vrot.lane.b32.xlu0 %v402, 16
        %v448 = vpop.permute.xlu0 %447
        %vm449 = vcmp.lt.s32.totalorder %v423, 16
        %v450 = vsel %vm449, %v446, %v448
        %v451 = vsel %vm449, %v448, %v446
        %v452 = vlaneseq
        %v453 = vshrl.u32 %v452, 7
        %v454 = vsub.s32 1, %v453
        %v455 = vrot.slane %v409, %v454
        %v456 = vlaneseq
        %v457 = vshrl.u32 %v456, 7
        %v458 = vsub.s32 1, %v457
        %v459 = vrot.slane %v410, %v458
        %v460 = vmul.f32 %v451, %v455
        %v461 = vmul.f32 %v450, %v459
        %462 = vset.pattern.permute.xlu0 1
        %463 = vperm.xlu0 %462, %v408
        %v464 = vpop.permute.xlu0 %463
        %v466 = vmul.f32 %v464, %v460
        %v467 = vmul.f32 %v464, %v461
        %v468 = vadd.f32 %v443, %v466
        %v469 = vadd.f32 %v444, %v467
        %470 = vrot.lane.b32.xlu0 %v401, 15
        %v471 = vpop.permute.xlu0 %470
        %472 = vrot.lane.b32.xlu0 %v402, 15
        %v473 = vpop.permute.xlu0 %472
        %vm474 = vcmp.lt.s32.totalorder %v423, 15
        %v475 = vsel %vm474, %v471, %v473
        %v476 = vsel %vm474, %v473, %v471
        %v477 = vlaneseq
        %v478 = vshrl.u32 %v477, 7
        %v479 = vsub.s32 2, %v478
        %v480 = vrot.slane %v409, %v479
        %v481 = vlaneseq
        %v482 = vshrl.u32 %v481, 7
        %v483 = vsub.s32 2, %v482
        %v484 = vrot.slane %v410, %v483
        %v485 = vmul.f32 %v476, %v480
        %v486 = vmul.f32 %v475, %v484
        %487 = vset.pattern.permute.xlu0 2
        %488 = vperm.xlu0 %487, %v408
        %v489 = vpop.permute.xlu0 %488
        %v491 = vmul.f32 %v489, %v485
        %v492 = vmul.f32 %v489, %v486
        %v493 = vadd.f32 %v468, %v491
        %v494 = vadd.f32 %v469, %v492
        %495 = vrot.lane.b32.xlu0 %v401, 1
        %v496 = vpop.permute.xlu0 %495
        %497 = vrot.lane.b32.xlu0 %v402, 1
        %v498 = vpop.permute.xlu0 %497
        %vm499 = vcmp.lt.s32.totalorder %v423, 1
        %v500 = vsel %vm499, %v496, %v498
        %v501 = vsel %vm499, %v498, %v496
        %v502 = vlaneseq
        %v503 = vshrl.u32 %v502, 7
        %v504 = vsub.s32 3, %v503
        %v505 = vrot.slane %v409, %v504
        %v506 = vlaneseq
        %v507 = vshrl.u32 %v506, 7
        %v508 = vsub.s32 3, %v507
        %v509 = vrot.slane %v410, %v508
        %v510 = vmul.f32 %v501, %v505
        %v511 = vmul.f32 %v500, %v509
        %512 = vset.pattern.permute.xlu0 3
        %513 = vperm.xlu0 %512, %v408
        %v514 = vpop.permute.xlu0 %513
        %v516 = vmul.f32 %v514, %v510
        %v517 = vmul.f32 %v514, %v511
        %v518 = vadd.f32 %v493, %v516
        %v519 = vadd.f32 %v494, %v517
        %520 = vrot.lane.b32.xlu0 %v401, 127
        %v521 = vpop.permute.xlu0 %520
        %522 = vrot.lane.b32.xlu0 %v402, 127
        %v523 = vpop.permute.xlu0 %522
        %vm524 = vcmp.lt.s32.totalorder %v423, 127
        %v525 = vsel %vm524, %v521, %v523
        %v526 = vsel %vm524, %v523, %v521
        %v527 = vlaneseq
        %v528 = vshrl.u32 %v527, 7
        %v529 = vsub.s32 4, %v528
        %v530 = vrot.slane %v409, %v529
        %v531 = vlaneseq
        %v532 = vshrl.u32 %v531, 7
        %v533 = vsub.s32 4, %v532
        %v534 = vrot.slane %v410, %v533
        %v535 = vmul.f32 %v525, %v530
        %v536 = vmul.f32 %v526, %v534
        %537 = vset.pattern.permute.xlu0 5
        %538 = vperm.xlu0 %537, %v408
        %v539 = vpop.permute.xlu0 %538
        %v541 = vmul.f32 %v539, %v535
        %v542 = vmul.f32 %v539, %v536
        %v543 = vadd.f32 %v518, %v541
        %v544 = vadd.f32 %v519, %v542
        %545 = vrot.lane.b32.xlu0 %v401, 113
        %v546 = vpop.permute.xlu0 %545
        %547 = vrot.lane.b32.xlu0 %v402, 113
        %v548 = vpop.permute.xlu0 %547
        %vm549 = vcmp.lt.s32.totalorder %v423, 113
        %v550 = vsel %vm549, %v546, %v548
        %v551 = vsel %vm549, %v548, %v546
        %v552 = vlaneseq
        %v553 = vshrl.u32 %v552, 7
        %v554 = vsub.s32 5, %v553
        %v555 = vrot.slane %v409, %v554
        %v556 = vlaneseq
        %v557 = vshrl.u32 %v556, 7
        %v558 = vsub.s32 5, %v557
        %v559 = vrot.slane %v410, %v558
        %v560 = vmul.f32 %v550, %v555
        %v561 = vmul.f32 %v551, %v559
        %562 = vset.pattern.permute.xlu0 6
        %563 = vperm.xlu0 %562, %v408
        %v564 = vpop.permute.xlu0 %563
        %v566 = vmul.f32 %v564, %v560
        %v567 = vmul.f32 %v564, %v561
        %v568 = vadd.f32 %v543, %v566
        %v569 = vadd.f32 %v544, %v567
        %570 = vrot.lane.b32.xlu0 %v401, 112
        %v571 = vpop.permute.xlu0 %570
        %572 = vrot.lane.b32.xlu0 %v402, 112
        %v573 = vpop.permute.xlu0 %572
        %vm574 = vcmp.lt.s32.totalorder %v423, 112
        %v575 = vsel %vm574, %v571, %v573
        %v576 = vsel %vm574, %v573, %v571
        %v577 = vlaneseq
        %v578 = vshrl.u32 %v577, 7
        %v579 = vsub.s32 6, %v578
        %v580 = vrot.slane %v409, %v579
        %v581 = vlaneseq
        %v582 = vshrl.u32 %v581, 7
        %v583 = vsub.s32 6, %v582
        %v584 = vrot.slane %v410, %v583
        %v585 = vmul.f32 %v575, %v580
        %v586 = vmul.f32 %v576, %v584
        %587 = vset.pattern.permute.xlu0 7
        %588 = vperm.xlu0 %587, %v408
        %v589 = vpop.permute.xlu0 %588
        %v591 = vmul.f32 %v589, %v585
        %v592 = vmul.f32 %v589, %v586
        %v593 = vadd.f32 %v568, %v591
        %v594 = vadd.f32 %v569, %v592
        %595 = vrot.lane.b32.xlu0 %v401, 111
        %v596 = vpop.permute.xlu0 %595
        %597 = vrot.lane.b32.xlu0 %v402, 111
        %v598 = vpop.permute.xlu0 %597
        %vm599 = vcmp.lt.s32.totalorder %v423, 111
        %v600 = vsel %vm599, %v596, %v598
        %v601 = vsel %vm599, %v598, %v596
        %v602 = vlaneseq
        %v603 = vshrl.u32 %v602, 7
        %v604 = vsub.s32 7, %v603
        %v605 = vrot.slane %v409, %v604
        %v606 = vlaneseq
        %v607 = vshrl.u32 %v606, 7
        %v608 = vsub.s32 7, %v607
        %v609 = vrot.slane %v410, %v608
        %v610 = vmul.f32 %v600, %v605
        %v611 = vmul.f32 %v601, %v609
        %612 = vset.pattern.permute.xlu0 8
        %613 = vperm.xlu0 %612, %v408
        %v614 = vpop.permute.xlu0 %613
        %v616 = vmul.f32 %v614, %v610
        %v617 = vmul.f32 %v614, %v611
        %v618 = vadd.f32 %v593, %v616
        %v619 = vadd.f32 %v594, %v617
        %v620 = vld [vmem:[%s4] sm:$0xf]
        %622 = vset.pattern.permute.xlu0 0
        %623 = vperm.xlu0 %622, %v620
        %v624 = vpop.permute.xlu0 %623
        %v626 = vadd.f32 %v618, %v624
        %v627 = vadd.f32 %v619, %v624
        %v628 = vmul.f32 %v626, 0.1
        %v629 = vmul.f32 %v627, 0.1
        %v630 = vmax.f32 %v626, %v628
        %v631 = vmax.f32 %v627, %v629
        %v634 = vcombine.low %v630, %v631
        %636 = vst [vmem:[%s305] sm:$0xff] %v634
        %s637 = sand.u32 %s167, 1
        %s638 = scalar_lea.sflag [#allocation4], %s637
        %s639 = sand.u32 %s167, 1
        %s640 = smul.addr %s639, 8
        %s641 = scalar_lea.vmem [#allocation5], %s640
        %s642 = sand.u32 %s193, 1
        %s643 = scalar_lea.sflag [#allocation7], %s642
        %s644 = sand.u32 %s193, 1
        %s645 = smul.addr %s644, 8
        %s646 = scalar_lea.vmem [#allocation6], %s645
        // Predicated region
        $region49: #{tpu_custom_call.1} parent=43 // pred_check
          %p647 = pneg %p177
        $region50: #{tpu_custom_call.1} parent=43 // pred_check_branch
          %649 = sbr.rel (%p647) target = $region52
        $region51: #{tpu_custom_call.1} parent=43 // pred_region
          %s650 = smul.u32 2, %s28
          %s652 = ssub.s32 128, 128
          %653 = vsyncadd %s638, %s652
          %s654 = smul.addr %s650, 64
          %s655 = scalar_lea.hbm %s6, %s654
          %s657 = sshll.u32 %s641, 4
          %s658 = int_to_ptr.vmem [resolvable:$true] %s657
          %660 = dma.vmem_to_hbm [thread:$0]  %s658, 128, %s655, %s638
        $region52: #{tpu_custom_call.1} parent=43 // pred_fallthru
          _
        // Predicated region
        $region53: #{tpu_custom_call.1} parent=43 // pred_check
          %p661 = pneg %p203
        $region54: #{tpu_custom_call.1} parent=43 // pred_check_branch
          %663 = sbr.rel (%p661) target = $region56
        $region55: #{tpu_custom_call.1} parent=43 // pred_region
          %s664 = smul.u32 2, %s28
          %s666 = ssub.s32 128, 128
          %667 = vsyncadd %s643, %s666
          %s668 = smul.addr %s664, 64
          %s669 = scalar_lea.hbm %s7, %s668
          %s671 = sshll.u32 %s646, 4
          %s672 = int_to_ptr.vmem [resolvable:$true] %s671
          %674 = dma.vmem_to_hbm [thread:$0]  %s672, 128, %s669, %s643
        $region56: #{tpu_custom_call.1} parent=43 // pred_fallthru
          _
      $region44: #{tpu_custom_call.1} parent=5 // pred_fallthru
        _
      %p675 = scmp.le.s32.totalorder 2, %s23
      // Predicated region
      $region57: #{tpu_custom_call.1} parent=5 // pred_check
        %p676 = pneg %p675
      $region58: #{tpu_custom_call.1} parent=5 // pred_check_branch
        %678 = sbr.rel (%p676) target = $region60
      $region59: #{tpu_custom_call.1} parent=5 // pred_region
        %s679 = ssub.s32 %s23, 2
        // Predicated region
        $region61: #{tpu_custom_call.1} parent=59 // pred_check
          %p680 = pneg %p183
        $region62: #{tpu_custom_call.1} parent=59 // pred_check_branch
          %682 = sbr.rel (%p680) target = $region64
        $region63: #{tpu_custom_call.1} parent=59 // pred_region
          %s683 = sand.u32 %s168, 1
          %s684 = scalar_lea.sflag [#allocation4], %s683
          %s685 = sand.u32 %s168, 1
          %s686 = smul.addr %s685, 8
          %s687 = scalar_lea.vmem [#allocation5], %s686
          %688 = dma.done %s684, 128
        $region64: #{tpu_custom_call.1} parent=59 // pred_fallthru
          _
        // Predicated region
        $region65: #{tpu_custom_call.1} parent=59 // pred_check
          %p689 = pneg %p209
        $region66: #{tpu_custom_call.1} parent=59 // pred_check_branch
          %691 = sbr.rel (%p689) target = $region68
        $region67: #{tpu_custom_call.1} parent=59 // pred_region
          %s692 = sand.u32 %s194, 1
          %s693 = scalar_lea.sflag [#allocation7], %s692
          %s694 = sand.u32 %s194, 1
          %s695 = smul.addr %s694, 8
          %s696 = scalar_lea.vmem [#allocation6], %s695
          %697 = dma.done %s693, 128
        $region68: #{tpu_custom_call.1} parent=59 // pred_fallthru
          _
      $region60: #{tpu_custom_call.1} parent=5 // pred_fallthru
        _
    $region6: #{tpu_custom_call.1} parent=1 // loop_footer
      %s27 = sadd.s32 1, %s23
    $region7: #{tpu_custom_call.1} parent=1 // loop_footer_branch
      %22 = sbr.rel target = $region3
    $region8: #{tpu_custom_call.1} parent=1 // loop_exit
      _
    %698 = vsyncpa [#allocation3], 1
    %s699 = scalar_lea.sflag [#allocation3], 1
    %700 = vsyncpa %s699, 1
    %701 = vsyncpa [#allocation4], 1
    %s702 = scalar_lea.sflag [#allocation4], 1
    %703 = vsyncpa %s702, 1
    %704 = vsyncpa [#allocation7], 1
    %s705 = scalar_lea.sflag [#allocation7], 1
    %706 = vsyncpa %s705, 1

</llo_original>
